<compile_context>
chip_gen: v7x
topology: tpu7x:2x2x1
jax: 0.10.0
libtpu: 0.0.40
codegen_flags: <defaults>
</compile_context>

<pallas_src>
import functools

import jax
import jax.numpy as jnp
from jax.experimental import pallas as pl
from jax.experimental.pallas import tpu as pltpu

IN_H, IN_W = 21, 21
IN_DIM = IN_H * IN_W            # 441
OUT_DIM = 128
MAX_TM = 2048                   # max batch rows per grid step


def _kemb_kernel(x_ref, w_ref, b_ref, o_ref):
    # x_ref: (TM, 441)  w_ref: (441, 128)  b_ref: (1, 128)  o_ref: (TM, 128)
    acc = jnp.dot(x_ref[...], w_ref[...], preferred_element_type=jnp.float32)
    acc = acc + b_ref[...]                        # bias broadcast over rows (f32)
    o_ref[...] = jnp.maximum(acc, 0.0).astype(o_ref.dtype)


def prepare_params(weight, bias, param_dtype=jnp.float32):
    """One-time parameter prep (hoisted out of the per-call path).

    weight: (OUT_DIM, IN_DIM) PyTorch-style; bias: (OUT_DIM,).
    Returns (w_t, bias_2d): ((IN_DIM, OUT_DIM), (1, OUT_DIM)).  No K padding.
    """
    out_dim, _ = weight.shape
    w_t = weight.T.astype(param_dtype)            # (441, 128), VMEM-resident
    b2 = bias.reshape(1, out_dim).astype(jnp.float32)
    return w_t, b2


def _choose_tm(batch):
    """Pick the batch tile: big (<=MAX_TM), multiple of 8, even #steps for v7x."""
    if batch <= 8:
        return batch
    steps = max(2, 2 * ((batch + 2 * MAX_TM - 1) // (2 * MAX_TM)))  # even, >=2
    tm = (batch + steps - 1) // steps
    return min(MAX_TM, ((tm + 7) // 8) * 8)


@functools.partial(jax.jit, static_argnames=("out_dtype",))
def kemb_forward(k, w_t, b2, out_dtype=jnp.float32):
    """k: (B, 441) pre-flattened (preferred) or (B, 21, 21); w_t: (441, 128); b2: (1, 128)."""
    if k.ndim > 2:
        # Accepted for API parity with the PyTorch module, but callers should
        # pass pre-flattened (B, 441) to avoid a tile-padded relayout here.
        k = k.reshape(k.shape[0], -1)
    B, in_dim = k.shape
    k_dim, out_dim = w_t.shape
    assert in_dim == k_dim, (in_dim, k_dim)

    tm = _choose_tm(B)
    grid = ((B + tm - 1) // tm,)

    cost = pl.CostEstimate(
        flops=2 * B * in_dim * out_dim,
        transcendentals=0,
        bytes_accessed=(B * in_dim) * jnp.dtype(k.dtype).itemsize
        + (in_dim * out_dim) * jnp.dtype(w_t.dtype).itemsize
        + out_dim * 4
        + (B * out_dim) * jnp.dtype(out_dtype).itemsize,
    )

    return pl.pallas_call(
        _kemb_kernel,
        out_shape=jax.ShapeDtypeStruct((B, out_dim), out_dtype),
        grid_spec=pl.GridSpec(
            grid=grid,
            in_specs=[
                pl.BlockSpec((tm, in_dim), lambda i: (i, 0)),        # x tiles stream
                pl.BlockSpec((k_dim, out_dim), lambda i: (0, 0)),    # weight resident
                pl.BlockSpec((1, out_dim), lambda i: (0, 0)),        # bias resident
            ],
            out_specs=pl.BlockSpec((tm, out_dim), lambda i: (i, 0)),
        ),
        compiler_params=pltpu.CompilerParams(
            dimension_semantics=("parallel",),        # batch axis -> both TCs on v7x
            vmem_limit_bytes=32 * 1024 * 1024,        # headroom vs v5e's 16 MiB default
        ),
        cost_estimate=cost,
    )(k, w_t, b2)


def reference_forward(x_flat, weight, bias):
    return jnp.maximum(x_flat @ weight.T + bias, 0.0)


if __name__ == "__main__":
    key = jax.random.PRNGKey(0)
    k_key, w_key, b_key, kbig_key = jax.random.split(key, 4)

    # Deterministic synthetic parameters (shapes match nn.Linear(441, 128)).
    bound = 1.0 / (IN_DIM ** 0.5)
    weight = jax.random.uniform(w_key, (OUT_DIM, IN_DIM), jnp.float32, -bound, bound)
    bias = jax.random.uniform(b_key, (OUT_DIM,), jnp.float32, -bound, bound)
    w_t, b2 = prepare_params(weight, bias, jnp.float32)

    # --- small batch, pre-flattened input (== k.view(B, -1) of a (B,21,21) tensor) ---
    B_SMALL = 2
    k_small = jax.random.normal(k_key, (B_SMALL, IN_DIM), jnp.float32)
    out_small = jax.block_until_ready(kemb_forward(k_small, w_t, b2))
    ref_small = reference_forward(k_small, weight, bias)
    assert out_small.shape == (B_SMALL, OUT_DIM)
    assert jnp.allclose(out_small, ref_small, atol=1e-4, rtol=1e-4), "small-batch mismatch"

    # --- larger batch: exercises the tiled grid, even split, ragged last tile ---
    B_BIG = 1030
    k_big = jax.random.normal(kbig_key, (B_BIG, IN_DIM), jnp.float32)
    out_big = jax.block_until_ready(kemb_forward(k_big, w_t, b2))
    ref_big = reference_forward(k_big, weight, bias)
    assert out_big.shape == (B_BIG, OUT_DIM)
    assert jnp.allclose(out_big, ref_big, atol=1e-4, rtol=1e-4), "big-batch mismatch"

    # --- 3-D input path (module-style (B, 21, 21)) still works ---
    k_3d = k_small.reshape(B_SMALL, IN_H, IN_W)
    out_3d = jax.block_until_ready(kemb_forward(k_3d, w_t, b2))
    assert jnp.allclose(out_3d, ref_small, atol=1e-4, rtol=1e-4), "3-D input mismatch"

    print("KERNEL_OK")
</pallas_src>

<mosaic_0001>
module attributes {stable_mosaic.version = 11 : i64} {
  func.func @_kemb_kernel(%arg0: i32, %arg1: memref<2x441xf32, #tpu.memory_space<vmem>>, %arg2: memref<441x128xf32, #tpu.memory_space<vmem>>, %arg3: memref<1x128xf32, #tpu.memory_space<vmem>>, %arg4: memref<2x128xf32, #tpu.memory_space<vmem>>) attributes {dimension_semantics = [#tpu.dimension_semantics<parallel>], iteration_bounds = array<i64: 1>, scalar_prefetch = 0 : i64, scratch_operands = 0 : i64, tpu.core_type = #tpu.core_type<tc>, window_params = [{transform_indices = @transform_0, window_bounds = array<i64: 2, 441>}, {pipeline_mode = #tpu.pipeline_mode<synchronous>, transform_indices = @transform_1, window_bounds = array<i64: 441, 128>}, {pipeline_mode = #tpu.pipeline_mode<synchronous>, transform_indices = @transform_2, window_bounds = array<i64: 1, 128>}, {transform_indices = @transform_3, window_bounds = array<i64: 2, 128>}]} {
    %c0 = arith.constant 0 : index
    %c0_0 = arith.constant 0 : index
    %0 = vector.load %arg1[%c0, %c0_0] : memref<2x441xf32, #tpu.memory_space<vmem>>, vector<2x441xf32>
    %c0_1 = arith.constant 0 : index
    %c0_2 = arith.constant 0 : index
    %1 = vector.load %arg2[%c0_1, %c0_2] : memref<441x128xf32, #tpu.memory_space<vmem>>, vector<441x128xf32>
    %cst = arith.constant dense<0.000000e+00> : vector<2x128xf32>
    %2 = tpu.matmul %0, %1, %cst {dimension_numbers = #tpu.dot_dimension_numbers<[1], [0], [0], [1], [0, 0, 1, 1], [], []>} : vector<2x441xf32>, vector<441x128xf32>, vector<2x128xf32> -> vector<2x128xf32>
    %c0_3 = arith.constant 0 : index
    %c0_4 = arith.constant 0 : index
    %3 = vector.load %arg3[%c0_3, %c0_4] : memref<1x128xf32, #tpu.memory_space<vmem>>, vector<1x128xf32>
    %4 = vector.broadcast %3 : vector<1x128xf32> to vector<2x128xf32>
    %5 = arith.addf %2, %4 : vector<2x128xf32>
    %cst_5 = arith.constant 0.000000e+00 : f32
    %6 = vector.broadcast %cst_5 : f32 to vector<2x128xf32>
    %7 = arith.maximumf %5, %6 : vector<2x128xf32>
    %c0_6 = arith.constant 0 : index
    %c0_7 = arith.constant 0 : index
    %8 = vector.load %arg4[%c0_6, %c0_7] : memref<2x128xf32, #tpu.memory_space<vmem>>, vector<2x128xf32>
    tpu.vector_store %arg4[%c0_6, %c0_7], %7 {strides = array<i32>} : memref<2x128xf32, #tpu.memory_space<vmem>>, vector<2x128xf32>,
    return
  }
  func.func @transform_0(%arg0: i32) -> (i32, i32) {
    %c0_i32 = arith.constant 0 : i32
    %c0_i32_0 = arith.constant 0 : i32
    return %arg0, %c0_i32 : i32, i32
  }
  func.func @transform_1(%arg0: i32) -> (i32, i32) {
    %c0_i32 = arith.constant 0 : i32
    %c0_i32_0 = arith.constant 0 : i32
    %c0_i32_1 = arith.constant 0 : i32
    return %c0_i32, %c0_i32_0 : i32, i32
  }
  func.func @transform_2(%arg0: i32) -> (i32, i32) {
    %c0_i32 = arith.constant 0 : i32
    %c0_i32_0 = arith.constant 0 : i32
    %c0_i32_1 = arith.constant 0 : i32
    return %c0_i32, %c0_i32_0 : i32, i32
  }
  func.func @transform_3(%arg0: i32) -> (i32, i32) {
    %c0_i32 = arith.constant 0 : i32
    %c0_i32_0 = arith.constant 0 : i32
    return %arg0, %c0_i32 : i32, i32
  }
}

</mosaic_0001>

<llo_original>
// kernel: kemb_forward.1
$region0: #{kemb_forward.1}
  #allocation0 [shape = 'u32[]', space=smem, size = 0x4, offset = 0x4, fixed_abs, tag = 'smem constant byte address 0x4 - core index']
  #allocation1 [shape = 'u32[144,128]{1,0:T(1,128)}', space=vmem, size = 0x12000, scoped, tag = 'internal scratch']
  %s0 = inlined_call_operand.hbm [shape: f32[2,441], index: 0, kind: input, shape index: {}]
  %s1 = inlined_call_operand.hbm [shape: f32[441,128], index: 1, kind: input, shape index: {}]
  %s2 = inlined_call_operand.vmem [shape: f32[1,128], index: 2, kind: input, shape index: {}]
  %s3 = inlined_call_operand.hbm [shape: f32[2,128], index: 3, kind: output, shape index: {}]
  %s4 = sld [smem:[#allocation0]]
  $region30: #{kemb_forward.1} parent=0
    _
  %s6 = ssub.s32 1, %s4
  %s7 = scalar_select 0, %s6, %s4
  $region1: #{kemb_forward.1} parent=0
    #allocation2 [shape = 'u8[4096]{0}', space=vmem, size = 0x1000, scoped, tag = 'input window, operand 0, single buffered']
    #allocation3 [shape = 's32[1]{0}', space=sflag, size = 0x4, scoped, tag = 'scoped memory for kemb_forward.1']
    #allocation4 [shape = 's32[1]{0}', space=sflag, size = 0x4, scoped, tag = 'scoped memory for kemb_forward.1']
    #allocation5 [shape = 'u8[229376]{0}', space=vmem, size = 0x38000, scoped, tag = 'input window, operand 1, single buffered']
    #allocation6 [shape = 's32[1]{0}', space=sflag, size = 0x4, scoped, tag = 'scoped memory for kemb_forward.1']
    #allocation7 [shape = 'u8[1024]{0}', space=vmem, size = 0x400, scoped, tag = 'output window, operand 0, single buffered']
    %8 = vsyncpa [#allocation3], 0
    %9 = vsyncpa [#allocation6], 0
    %10 = vsyncpa [#allocation4], 0
    // Predicated region
    $region2: #{kemb_forward.1} parent=1 // pred_check
      _
    $region3: #{kemb_forward.1} parent=1 // pred_check_branch
      %12 = sbr.rel (0) target = $region5
    $region4: #{kemb_forward.1} parent=1 // pred_region
      %s14 = ssub.s32 128, 128
      %15 = vsyncadd [#allocation3], %s14
      %s17 = sshll.u32 [#allocation2], 4
      %s18 = int_to_ptr.vmem [resolvable:$true] %s17
      %20 = dma.hbm_to_vmem [thread:$0]  %s0, 128, %s18, [#allocation3]
    $region5: #{kemb_forward.1} parent=1 // pred_fallthru
      _
    // Predicated region
    $region6: #{kemb_forward.1} parent=1 // pred_check
      _
    $region7: #{kemb_forward.1} parent=1 // pred_check_branch
      %22 = sbr.rel (0) target = $region9
    $region8: #{kemb_forward.1} parent=1 // pred_region
      %s24 = ssub.s32 7168, 7168
      %25 = vsyncadd [#allocation6], %s24
      %s26 = sshll.u32 [#allocation5], 4
      %s27 = int_to_ptr.vmem [resolvable:$true] %s26
      %32 = dma.hbm_to_vmem [thread:$0]  %s1, 7168, %s27, [#allocation6], 128, 128, 8
    $region9: #{kemb_forward.1} parent=1 // pred_fallthru
      _
    // Predicated region
    $region10: #{kemb_forward.1} parent=1 // pred_check
      _
    $region11: #{kemb_forward.1} parent=1 // pred_check_branch
      %34 = sbr.rel (0) target = $region13
    $region12: #{kemb_forward.1} parent=1 // pred_region
      _
    $region13: #{kemb_forward.1} parent=1 // pred_fallthru
      _
    // Predicated region
    $region14: #{kemb_forward.1} parent=1 // pred_check
      _
    $region15: #{kemb_forward.1} parent=1 // pred_check_branch
      %36 = sbr.rel (0) target = $region17
    $region16: #{kemb_forward.1} parent=1 // pred_region
      %37 = dma.done [#allocation3], 128
    $region17: #{kemb_forward.1} parent=1 // pred_fallthru
      _
    // Predicated region
    $region18: #{kemb_forward.1} parent=1 // pred_check
      _
    $region19: #{kemb_forward.1} parent=1 // pred_check_branch
      %39 = sbr.rel (0) target = $region21
    $region20: #{kemb_forward.1} parent=1 // pred_region
      %40 = dma.done [#allocation6], 7168
    $region21: #{kemb_forward.1} parent=1 // pred_fallthru
      _
    %v41 = vld [vmem:[#allocation2] sm:$0xff]
    %v42 = vld [vmem:[#allocation5] sm:$0xff]
    %v43 = vld [vmem:[#allocation5 + $0x8] sm:$0xff]
    %v44 = vld [vmem:[#allocation5 + $0x10] sm:$0xff]
    %v45 = vld [vmem:[#allocation5 + $0x18] sm:$0xff]
    %v46 = vld [vmem:[#allocation5 + $0x20] sm:$0xff]
    %v47 = vld [vmem:[#allocation5 + $0x28] sm:$0xff]
    %v48 = vld [vmem:[#allocation5 + $0x30] sm:$0xff]
    %v49 = vld [vmem:[#allocation5 + $0x38] sm:$0xff]
    %v50 = vld [vmem:[#allocation5 + $0x40] sm:$0xff]
    %v51 = vld [vmem:[#allocation5 + $0x48] sm:$0xff]
    %v52 = vld [vmem:[#allocation5 + $0x50] sm:$0xff]
    %v53 = vld [vmem:[#allocation5 + $0x58] sm:$0xff]
    %v54 = vld [vmem:[#allocation5 + $0x60] sm:$0xff]
    %v55 = vld [vmem:[#allocation5 + $0x68] sm:$0xff]
    %v56 = vld [vmem:[#allocation5 + $0x70] sm:$0xff]
    %v57 = vld [vmem:[#allocation5 + $0x78] sm:$0xff]
    %v58 = vld [vmem:[#allocation5 + $0x80] sm:$0xff]
    %v59 = vld [vmem:[#allocation5 + $0x88] sm:$0xff]
    %v60 = vld [vmem:[#allocation5 + $0x90] sm:$0xff]
    %v61 = vld [vmem:[#allocation5 + $0x98] sm:$0xff]
    %v62 = vld [vmem:[#allocation5 + $0xa0] sm:$0xff]
    %v63 = vld [vmem:[#allocation5 + $0xa8] sm:$0xff]
    %v64 = vld [vmem:[#allocation5 + $0xb0] sm:$0xff]
    %v65 = vld [vmem:[#allocation5 + $0xb8] sm:$0xff]
    %v66 = vld [vmem:[#allocation5 + $0xc0] sm:$0xff]
    %v67 = vld [vmem:[#allocation5 + $0xc8] sm:$0xff]
    %v68 = vld [vmem:[#allocation5 + $0xd0] sm:$0xff]
    %v69 = vld [vmem:[#allocation5 + $0xd8] sm:$0xff]
    %v70 = vld [vmem:[#allocation5 + $0xe0] sm:$0xff]
    %v71 = vld [vmem:[#allocation5 + $0xe8] sm:$0xff]
    %v72 = vld [vmem:[#allocation5 + $0xf0] sm:$0xff]
    %v73 = vld [vmem:[#allocation5 + $0xf8] sm:$0xff]
    %v74 = vld [vmem:[#allocation5 + $0x100] sm:$0xff]
    %v75 = vld [vmem:[#allocation5 + $0x108] sm:$0xff]
    %v76 = vld [vmem:[#allocation5 + $0x110] sm:$0xff]
    %v77 = vld [vmem:[#allocation5 + $0x118] sm:$0xff]
    %v78 = vld [vmem:[#allocation5 + $0x120] sm:$0xff]
    %v79 = vld [vmem:[#allocation5 + $0x128] sm:$0xff]
    %v80 = vld [vmem:[#allocation5 + $0x130] sm:$0xff]
    %v81 = vld [vmem:[#allocation5 + $0x138] sm:$0xff]
    %v82 = vld [vmem:[#allocation5 + $0x140] sm:$0xff]
    %v83 = vld [vmem:[#allocation5 + $0x148] sm:$0xff]
    %v84 = vld [vmem:[#allocation5 + $0x150] sm:$0xff]
    %v85 = vld [vmem:[#allocation5 + $0x158] sm:$0xff]
    %v86 = vld [vmem:[#allocation5 + $0x160] sm:$0xff]
    %v87 = vld [vmem:[#allocation5 + $0x168] sm:$0xff]
    %v88 = vld [vmem:[#allocation5 + $0x170] sm:$0xff]
    %v89 = vld [vmem:[#allocation5 + $0x178] sm:$0xff]
    %v90 = vld [vmem:[#allocation5 + $0x180] sm:$0xff]
    %v91 = vld [vmem:[#allocation5 + $0x188] sm:$0xff]
    %v92 = vld [vmem:[#allocation5 + $0x190] sm:$0xff]
    %v93 = vld [vmem:[#allocation5 + $0x198] sm:$0xff]
    %v94 = vld [vmem:[#allocation5 + $0x1a0] sm:$0xff]
    %v95 = vld [vmem:[#allocation5 + $0x1a8] sm:$0xff]
    %v96 = vld [vmem:[#allocation5 + $0x1b0] sm:$0xff]
    %v97 = vld [vmem:[#allocation5 + $0x1b8] sm:$0x1]
    %v98 = vld [vmem:[%s2] sm:$0x1]
    %v100 = vlaneseq
    %v101 = vshrl.u32 %v100, 7
    %v102 = vsub.s32 0, %v101
    %v103 = vrot.slane %v98, %v102
    %v106 = vcombine.high %v41, %v41
    %v108 = vunpack.c.l.s4 1983009808
    %v109 = vunpack.c.0.s8 %v108
    %v110 = vlaneseq
    %v111 = vshrl.u32 %v110, 7
    %v112 = vsub.s32 %v109, %v111
    %v113 = vrot.slane %v41, %v112
    %v115 = vunpack.c.l.s4 1983009808
    %v116 = vunpack.c.0.s8 %v115
    %v117 = vlaneseq
    %v118 = vshrl.u32 %v117, 7
    %v119 = vsub.s32 %v116, %v118
    %v120 = vrot.slane %v106, %v119
    %v121 = vcombine.high %v113, %v113
    %v122 = vcombine.high %v120, %v120
    %vm126 = vcmask 465920
    %v127 = vsel %vm126, %v122, 0
    %vm129 = vcmask 1040384
    %v131 = vsel %vm129, %v97, 0
    %133 = vmatprep.subr.mxu0 0.0
    %134 = vmatpush1.msra.mxu0 %v42
    %135 = vmatprep.subr.mxu0 0.0
    %136 = vmatpush1.msra.mxu0 %v43
    %137 = vmatprep.subr.mxu0 0.0
    %138 = vmatpush1.msra.mxu0 %v44
    %139 = vmatprep.subr.mxu0 0.0
    %140 = vmatpush1.msra.mxu0 %v45
    %141 = vmatprep.subr.mxu0 0.0
    %142 = vmatpush1.msra.mxu0 %v46
    %143 = vmatprep.subr.mxu0 0.0
    %144 = vmatpush1.msra.mxu0 %v47
    %145 = vmatprep.subr.mxu0 0.0
    %146 = vmatpush1.msra.mxu0 %v48
    %147 = vmatprep.subr.mxu0 0.0
    %148 = vmatpush1.msra.mxu0 %v49
    %149 = vmatprep.subr.mxu0 0.0
    %150 = vmatpush1.msra.mxu0 %v50
    %151 = vmatprep.subr.mxu0 0.0
    %152 = vmatpush1.msra.mxu0 %v51
    %153 = vmatprep.subr.mxu0 0.0
    %154 = vmatpush1.msra.mxu0 %v52
    %155 = vmatprep.subr.mxu0 0.0
    %156 = vmatpush1.msra.mxu0 %v53
    %157 = vmatprep.subr.mxu0 0.0
    %158 = vmatpush1.msra.mxu0 %v54
    %159 = vmatprep.subr.mxu0 0.0
    %160 = vmatpush1.msra.mxu0 %v55
    %161 = vmatprep.subr.mxu0 0.0
    %162 = vmatpush1.msra.mxu0 %v56
    %163 = vmatprep.subr.mxu0 0.0
    %164 = vmatpush1.msra.mxu0 %v57
    %165 = vmatprep.subr.mxu0 0.0
    %166 = vmatpush1.msra.mxu0 %v58
    %167 = vmatprep.subr.mxu0 0.0
    %168 = vmatpush1.msra.mxu0 %v59
    %169 = vmatprep.subr.mxu0 0.0
    %170 = vmatpush1.msra.mxu0 %v60
    %171 = vmatprep.subr.mxu0 0.0
    %172 = vmatpush1.msra.mxu0 %v61
    %173 = vmatprep.subr.mxu0 0.0
    %174 = vmatpush1.msra.mxu0 %v62
    %175 = vmatprep.subr.mxu0 0.0
    %176 = vmatpush1.msra.mxu0 %v63
    %177 = vmatprep.subr.mxu0 0.0
    %178 = vmatpush1.msra.mxu0 %v64
    %179 = vmatprep.subr.mxu0 0.0
    %180 = vmatpush1.msra.mxu0 %v65
    %181 = vmatprep.subr.mxu0 0.0
    %182 = vmatpush1.msra.mxu0 %v66
    %183 = vmatprep.subr.mxu0 0.0
    %184 = vmatpush1.msra.mxu0 %v67
    %185 = vmatprep.subr.mxu0 0.0
    %186 = vmatpush1.msra.mxu0 %v68
    %187 = vmatprep.subr.mxu0 0.0
    %188 = vmatpush1.msra.mxu0 %v69
    %189 = vmatprep.subr.mxu0 0.0
    %190 = vmatpush1.msra.mxu0 %v70
    %191 = vmatprep.subr.mxu0 0.0
    %192 = vmatpush1.msra.mxu0 %v71
    %193 = vmatprep.subr.mxu0 0.0
    %194 = vmatpush1.msra.mxu0 %v72
    %195 = vmatprep.subr.mxu0 0.0
    %196 = vmatpush1.msra.mxu0 %v73
    %197 = vmatprep.mubr.f32.mxu0 %v121
    %198 = vmatmul.mubr.f32.gmra.mrb[0].mxu0 %v113
    %v199 = vpop.f32.mrb[0].mxu0
    %v200 = vadd.f32 %v103, %v199
    %v201 = vpop.f32.mrb[0].mxu0
    %202 = vdwg.mxu0
    %203 = vmatprep.subr.mxu0 0.0
    %204 = vmatpush1.msra.mxu0 %v74
    %205 = vmatprep.subr.mxu0 0.0
    %206 = vmatpush1.msra.mxu0 %v75
    %207 = vmatprep.subr.mxu0 0.0
    %208 = vmatpush1.msra.mxu0 %v76
    %209 = vmatprep.subr.mxu0 0.0
    %210 = vmatpush1.msra.mxu0 %v77
    %211 = vmatprep.subr.mxu0 0.0
    %212 = vmatpush1.msra.mxu0 %v78
    %213 = vmatprep.subr.mxu0 0.0
    %214 = vmatpush1.msra.mxu0 %v79
    %215 = vmatprep.subr.mxu0 0.0
    %216 = vmatpush1.msra.mxu0 %v80
    %217 = vmatprep.subr.mxu0 0.0
    %218 = vmatpush1.msra.mxu0 %v81
    %219 = vmatprep.subr.mxu0 0.0
    %220 = vmatpush1.msra.mxu0 %v82
    %221 = vmatprep.subr.mxu0 0.0
    %222 = vmatpush1.msra.mxu0 %v83
    %223 = vmatprep.subr.mxu0 0.0
    %224 = vmatpush1.msra.mxu0 %v84
    %225 = vmatprep.subr.mxu0 0.0
    %226 = vmatpush1.msra.mxu0 %v85
    %227 = vmatprep.subr.mxu0 0.0
    %228 = vmatpush1.msra.mxu0 %v86
    %229 = vmatprep.subr.mxu0 0.0
    %230 = vmatpush1.msra.mxu0 %v87
    %231 = vmatprep.subr.mxu0 0.0
    %232 = vmatpush1.msra.mxu0 %v88
    %233 = vmatprep.subr.mxu0 0.0
    %234 = vmatpush1.msra.mxu0 %v89
    %235 = vmatprep.subr.mxu0 0.0
    %236 = vmatpush1.msra.mxu0 %v90
    %237 = vmatprep.subr.mxu0 0.0
    %238 = vmatpush1.msra.mxu0 %v91
    %239 = vmatprep.subr.mxu0 0.0
    %240 = vmatpush1.msra.mxu0 %v92
    %241 = vmatprep.subr.mxu0 0.0
    %242 = vmatpush1.msra.mxu0 %v93
    %243 = vmatprep.subr.mxu0 0.0
    %244 = vmatpush1.msra.mxu0 %v94
    %245 = vmatprep.subr.mxu0 0.0
    %246 = vmatpush1.msra.mxu0 %v95
    %247 = vmatprep.subr.mxu0 0.0
    %248 = vmatpush1.msra.mxu0 %v96
    %249 = vmatprep.subr.mxu0 0.0
    %250 = vmatpush1.msra.mxu0 %v131
    %251 = vmatprep.subr.mxu0 0.0
    %252 = vmatpush1.msra.mxu0 0.0
    %253 = vmatprep.subr.mxu0 0.0
    %254 = vmatpush1.msra.mxu0 0.0
    %255 = vmatprep.subr.mxu0 0.0
    %256 = vmatpush1.msra.mxu0 0.0
    %257 = vmatprep.subr.mxu0 0.0
    %258 = vmatpush1.msra.mxu0 0.0
    %259 = vmatprep.subr.mxu0 0.0
    %260 = vmatpush1.msra.mxu0 0.0
    %261 = vmatprep.subr.mxu0 0.0
    %262 = vmatpush1.msra.mxu0 0.0
    %263 = vmatprep.subr.mxu0 0.0
    %264 = vmatpush1.msra.mxu0 0.0
    %265 = vmatprep.subr.mxu0 0.0
    %266 = vmatpush1.msra.mxu0 0.0
    %267 = vmatprep.mubr.f32.mxu0 %v127
    %268 = vmatmul.mubr.f32.gmra.mrb[0].mxu0 %v120
    %v269 = vpop.f32.mrb[0].mxu0
    %v270 = vadd.f32 %v200, %v269
    %v271 = vpop.f32.mrb[0].mxu0
    %272 = vdwg.mxu0
    %v273 = vmax.f32 %v270, 0.0
    %274 = vst [vmem:[#allocation7] sm:$0x3] %v273
    // Predicated region
    $region22: #{kemb_forward.1} parent=1 // pred_check
      _
    $region23: #{kemb_forward.1} parent=1 // pred_check_branch
      %276 = sbr.rel (0) target = $region25
    $region24: #{kemb_forward.1} parent=1 // pred_region
      %s278 = ssub.s32 32, 32
      %279 = vsyncadd [#allocation4], %s278
      %s281 = sshll.u32 [#allocation7], 4
      %s282 = int_to_ptr.vmem [resolvable:$true] %s281
      %284 = dma.vmem_to_hbm [thread:$0]  %s282, 32, %s3, [#allocation4]
    $region25: #{kemb_forward.1} parent=1 // pred_fallthru
      _
    // Predicated region
    $region26: #{kemb_forward.1} parent=1 // pred_check
      _
    $region27: #{kemb_forward.1} parent=1 // pred_check_branch
      %286 = sbr.rel (0) target = $region29
    $region28: #{kemb_forward.1} parent=1 // pred_region
      %287 = dma.done [#allocation4], 32
    $region29: #{kemb_forward.1} parent=1 // pred_fallthru
      _
    %288 = vsyncpa [#allocation3], 1
    %289 = vsyncpa [#allocation6], 1
    %290 = vsyncpa [#allocation4], 1

</llo_original>
